<compile_context>
chip_gen: v7x
topology: tpu7x:2x2x1
jax: 0.10.0
libtpu: 0.0.40
codegen_flags: <defaults>
</compile_context>

<pallas_src>
import functools

import jax
import jax.numpy as jnp
import numpy as np
from jax.experimental import pallas as pl
from jax.experimental.pallas import tpu as pltpu

_NEG = -1e30                      # "minus infinity" that stays finite
_MAX_TB = 256                     # sublane tile cap for B
_TARGET_BLOCK_ELEMS = 2 * 1024 * 1024   # ~8 MiB f32 / 4 MiB bf16 per input block
_VMEM_LIMIT = 48 * 1024 * 1024    # explicit scoped-VMEM raise (safe on v5e..v7x)
_MAX_TBJ = 512                    # lane tile cap for kernel 2's rank reduction


def _round_up(v, m):
    return ((v + m - 1) // m) * m


# --------------------------------------------------------------------------
# Kernel 1: per-row cross-entropy against class 0 (online logsumexp over K)
# --------------------------------------------------------------------------
def _row_ce_kernel(x_ref, loss_ref, x0_ref, m_ref, s_ref, *, tk, k_total, mask_k):
    k = pl.program_id(1)
    nk = pl.num_programs(1)

    @pl.when(k == 0)
    def _init():
        m_ref[...] = jnp.full_like(m_ref, _NEG)
        s_ref[...] = jnp.zeros_like(s_ref)
        # global column 0 (the positive logit) lives in the first K block
        x0_ref[...] = x_ref[:, 0:1].astype(jnp.float32)

    x_nat = x_ref[...]                                    # native dtype (no f32 copy)
    if mask_k:  # static flag: only emitted when K % TK != 0 (ragged last block)
        col = jax.lax.broadcasted_iota(jnp.int32, (1, tk), 1)
        valid = col < (k_total - k * tk)                  # (1, TK) bool, scalar compare
        x_for_max = jnp.where(valid, x_nat, jnp.asarray(_NEG, x_nat.dtype))
    else:
        x_for_max = x_nat

    # Running max reduced in the native dtype; only the (TB,1) result is upcast.
    blk_max = jnp.max(x_for_max, axis=-1, keepdims=True).astype(jnp.float32)
    m_prev = m_ref[...]
    m_cur = jnp.maximum(m_prev, blk_max)
    alpha = jnp.exp(m_prev - m_cur)

    # Upcast fused into the exp pass (no standalone full-tile astype pass).
    # TODO(synk): if bundle dumps show the single EUP saturating on v7x bf16
    # inputs, compute this exp in bf16 and accumulate the row sum in f32.
    e = jnp.exp(x_nat.astype(jnp.float32) - m_cur)        # (TB, TK) f32
    if mask_k:
        e = jnp.where(valid, e, 0.0)                      # kills OOB garbage/NaN cols

    s_ref[...] = alpha * s_ref[...] + jnp.sum(e, axis=-1, keepdims=True)
    m_ref[...] = m_cur

    @pl.when(k == nk - 1)
    def _finalize():
        # loss_i = logsumexp_i - x_i[0]
        loss_ref[...] = m_ref[...] + jnp.log(s_ref[...]) - x0_ref[...]


def _per_row_ce(logits, *, max_tk=None):
    """logits: (B, K) in native dtype -> (B, 1) float32 per-sample CE loss."""
    B, K = logits.shape
    itemsize = jnp.dtype(logits.dtype).itemsize

    # B tiling: keep >=2 blocks when possible so the "parallel" axis shards
    # across both v7x TensorCores; TB is a multiple of 8 (sublane) unless it
    # equals the full extent.
    TB = min(_MAX_TB, _round_up(pl.cdiv(B, 2), 8))
    if TB >= B:
        TB = B
    nb = pl.cdiv(B, TB)

    # K tiling: ~2M-element blocks (8 MiB f32 / 4 MiB bf16) amortize the
    # per-grid-step overhead; the element budget also bounds the in-kernel
    # f32 exp temporary so everything stays well inside the 48 MiB limit.
    tk_cap = _TARGET_BLOCK_ELEMS // max(TB, 8)
    if max_tk is not None:                      # test / tuning override
        tk_cap = min(tk_cap, max_tk)
    if K <= tk_cap:
        TK = K
    else:
        TK = max(128, (tk_cap // 128) * 128)
    nk = pl.cdiv(K, TK)

    kernel = functools.partial(_row_ce_kernel, tk=TK, k_total=K,
                               mask_k=(K % TK != 0))
    return pl.pallas_call(
        kernel,
        out_shape=jax.ShapeDtypeStruct((B, 1), jnp.float32),
        grid_spec=pltpu.PrefetchScalarGridSpec(
            num_scalar_prefetch=0,
            grid=(nb, nk),
            in_specs=[pl.BlockSpec((TB, TK), lambda i, k: (i, k))],
            out_specs=pl.BlockSpec((TB, 1), lambda i, k: (i, 0)),
            scratch_shapes=[
                pltpu.VMEM((TB, 1), jnp.float32),   # x0: positive logit
                pltpu.VMEM((TB, 1), jnp.float32),   # running max
                pltpu.VMEM((TB, 1), jnp.float32),   # running sum of exp
            ],
        ),
        compiler_params=pltpu.CompilerParams(
            dimension_semantics=("parallel", "arbitrary"),
            vmem_limit_bytes=_VMEM_LIMIT),
        cost_estimate=pl.CostEstimate(
            flops=3 * B * K,
            transcendentals=B * K,
            bytes_accessed=B * K * itemsize + B * 4),
    )(logits)


# --------------------------------------------------------------------------
# Kernel 2: quantile ('lower') threshold + strict-> filtered mean of losses
# --------------------------------------------------------------------------
def _quantile_filter_kernel(lc_ref, lr_ref, out_ref, rank_ref, *,
                            k_idx, tbj, b_total, mask_j):
    j = pl.program_id(0)
    nj = pl.num_programs(0)

    @pl.when(j == 0)
    def _init():
        rank_ref[...] = jnp.zeros_like(rank_ref)

    lc = lc_ref[...]                                       # (B, 1)   f32
    lr = lr_ref[...]                                       # (1, TBJ) f32
    i_idx = jax.lax.broadcasted_iota(jnp.int32, (lc.shape[0], 1), 0)   # (B, 1)
    j_idx = jax.lax.broadcasted_iota(jnp.int32, (1, tbj), 1) + j * tbj  # (1, TBJ)

    # Stable rank of L_i: #{j: L_j < L_i} + #{j < i: L_j == L_i}, fused into
    # one boolean contribution (keeps only ~1 live (B,TBJ) temp).
    contrib = (lr < lc) | ((lr == lc) & (j_idx < i_idx))
    if mask_j:  # ragged last j block: drop OOB garbage columns
        contrib = contrib & (j_idx < b_total)
    rank_ref[...] += jnp.sum(contrib.astype(jnp.int32), axis=1, keepdims=True)

    @pl.when(j == nj - 1)
    def _finalize():
        rank = rank_ref[...]                               # (B, 1) int32
        # np.quantile(..., 'lower') == k_idx-th order statistic.
        p = jnp.sum(jnp.where(rank == k_idx, lc, 0.0), axis=0, keepdims=True)
        keep = (lc > p).astype(jnp.float32)                # strict >
        cnt = jnp.sum(keep, axis=0, keepdims=True)
        tot = jnp.sum(lc * keep, axis=0, keepdims=True)
        # NaN (0/0) if nothing strictly exceeds p, matching the torch module's
        # degenerate behaviour for pp -> 1.0.
        out_ref[...] = tot / cnt


def _quantile_filtered_mean(losses, k_idx, *, max_tbj=None):
    """losses: (B, 1) f32 -> (1, 1) f32 filtered mean above the pp-quantile."""
    B = losses.shape[0]
    tbj_cap = _MAX_TBJ if max_tbj is None else max_tbj
    if B <= tbj_cap:
        TBJ = B
    else:
        TBJ = max(128, (tbj_cap // 128) * 128)
    nj = pl.cdiv(B, TBJ)

    # TODO(synk): for very large B (>~10K) the resident (B,1) column plus
    # (B,TBJ) tiles get big; select the threshold with an XLA sort instead.
    kernel = functools.partial(_quantile_filter_kernel, k_idx=k_idx, tbj=TBJ,
                               b_total=B, mask_j=(B % TBJ != 0))
    return pl.pallas_call(
        kernel,
        out_shape=jax.ShapeDtypeStruct((1, 1), jnp.float32),
        grid_spec=pltpu.PrefetchScalarGridSpec(
            num_scalar_prefetch=0,
            grid=(nj,),
            in_specs=[pl.BlockSpec((B, 1), lambda j: (0, 0)),
                      pl.BlockSpec((1, TBJ), lambda j: (0, j))],
            out_specs=pl.BlockSpec((1, 1), lambda j: (0, 0)),
            scratch_shapes=[pltpu.VMEM((B, 1), jnp.int32)],   # stable rank acc
        ),
        compiler_params=pltpu.CompilerParams(
            dimension_semantics=("arbitrary",)),
    )(losses, losses.reshape(1, B))


# --------------------------------------------------------------------------
# Public wrapper (forward pass of NCESoftmaxLoss_sam)
# --------------------------------------------------------------------------
def nce_softmax_loss_sam(x, pp, *, max_tk=None, max_tbj=None):
    """x: logits squeezing to (bsz, K); pp: static Python float in [0, 1)."""
    bsz = x.shape[0]
    logits = jnp.squeeze(x).reshape(bsz, -1)   # native dtype; no wrapper f32 cast
    B, _ = logits.shape

    losses = _per_row_ce(logits, max_tk=max_tk)          # (B, 1) f32 per-sample CE
    k_idx = int(np.floor(pp * (B - 1)))                  # 'lower' quantile index
    out = _quantile_filtered_mean(losses, k_idx, max_tbj=max_tbj)
    return out[0, 0]


# --------------------------------------------------------------------------
# Pure JAX/numpy reference (mirrors the PyTorch module exactly)
# --------------------------------------------------------------------------
def _reference(x, pp):
    bsz = x.shape[0]
    logits = jnp.squeeze(x).reshape(bsz, -1).astype(jnp.float32)
    logp = jax.nn.log_softmax(logits, axis=-1)
    loss = np.asarray(-logp[:, 0])
    p = np.sort(loss)[int(np.floor(pp * (bsz - 1)))]     # quantile, 'lower'
    keep = loss > p
    return float(loss[keep].sum() / keep.sum())


if __name__ == "__main__":
    pp = 0.5
    key = jax.random.PRNGKey(0)
    k1, k2, k3 = jax.random.split(key, 3)

    # Case 1: GCC-style shape (bsz, 1 + num_negatives, 1), f32, single K block.
    x1 = jax.random.normal(k1, (8, 1 + 32, 1), dtype=jnp.float32)
    out1 = nce_softmax_loss_sam(x1, pp)
    jax.block_until_ready(out1)
    ref1 = _reference(x1, pp)
    assert abs(float(out1) - ref1) <= 1e-4 * max(1.0, abs(ref1)), (float(out1), ref1)

    # Case 2: bf16 input with a forced small K tile -> multi-block online
    # logsumexp (native-dtype DMA, fused upcast), ragged last K block, and
    # nb=2 on the parallel B axis.
    x2 = (2.0 * jax.random.normal(k2, (16, 1 + 700, 1), dtype=jnp.float32)
          ).astype(jnp.bfloat16)
    out2 = nce_softmax_loss_sam(x2, pp, max_tk=256)
    jax.block_until_ready(out2)
    ref2 = _reference(x2, pp)
    assert abs(float(out2) - ref2) <= 1e-3 * max(1.0, abs(ref2)), (float(out2), ref2)

    # Case 3: ragged trailing B block (B=150 -> TB=80, padded rows dropped on
    # writeback) and tiled kernel-2 rank reduction (TBJ=128, ragged last tile).
    x3 = jax.random.normal(k3, (150, 1 + 36, 1), dtype=jnp.float32)
    out3 = nce_softmax_loss_sam(x3, pp, max_tbj=128)
    jax.block_until_ready(out3)
    ref3 = _reference(x3, pp)
    assert abs(float(out3) - ref3) <= 1e-4 * max(1.0, abs(ref3)), (float(out3), ref3)

    print("KERNEL_OK")
</pallas_src>

<mosaic_0001>
module attributes {stable_mosaic.version = 11 : i64} {
  func.func @_row_ce_kernel(%arg0: i32, %arg1: i32, %arg2: memref<8x33xf32, #tpu.memory_space<vmem>>, %arg3: memref<8x1xf32, #tpu.memory_space<vmem>>, %arg4: memref<8x1xf32, #tpu.memory_space<vmem>>, %arg5: memref<8x1xf32, #tpu.memory_space<vmem>>, %arg6: memref<8x1xf32, #tpu.memory_space<vmem>>) attributes {dimension_semantics = [#tpu.dimension_semantics<parallel>, #tpu.dimension_semantics<arbitrary>], iteration_bounds = array<i64: 1, 1>, scalar_prefetch = 0 : i64, scratch_operands = 3 : i64, tpu.core_type = #tpu.core_type<tc>, window_params = [{transform_indices = @transform_0, window_bounds = array<i64: 8, 33>}, {transform_indices = @transform_1, window_bounds = array<i64: 8, 1>}]} {
    %c0_i32 = arith.constant 0 : i32
    %0 = arith.cmpi eq, %arg1, %c0_i32 : i32
    %1 = arith.extui %0 : i1 to i32
    %c0_i32_0 = arith.constant 0 : i32
    %2 = arith.cmpi ne, %1, %c0_i32_0 : i32
    scf.if %2 {
      %cst_13 = arith.constant -1.000000e+30 : f32
      %23 = vector.broadcast %cst_13 : f32 to vector<8x1xf32>
      %c0_14 = arith.constant 0 : index
      %c0_15 = arith.constant 0 : index
      %24 = vector.load %arg5[%c0_14, %c0_15] : memref<8x1xf32, #tpu.memory_space<vmem>>, vector<8x1xf32>
      tpu.vector_store %arg5[%c0_14, %c0_15], %23 {strides = array<i32>} : memref<8x1xf32, #tpu.memory_space<vmem>>, vector<8x1xf32>,
      %cst_16 = arith.constant 0.000000e+00 : f32
      %25 = vector.broadcast %cst_16 : f32 to vector<8x1xf32>
      %c0_17 = arith.constant 0 : index
      %c0_18 = arith.constant 0 : index
      %26 = vector.load %arg6[%c0_17, %c0_18] : memref<8x1xf32, #tpu.memory_space<vmem>>, vector<8x1xf32>
      tpu.vector_store %arg6[%c0_17, %c0_18], %25 {strides = array<i32>} : memref<8x1xf32, #tpu.memory_space<vmem>>, vector<8x1xf32>,
      %c0_19 = arith.constant 0 : index
      %c0_20 = arith.constant 0 : index
      %27 = vector.load %arg2[%c0_19, %c0_20] : memref<8x33xf32, #tpu.memory_space<vmem>>, vector<8x1xf32>
      %c0_21 = arith.constant 0 : index
      %c0_22 = arith.constant 0 : index
      %28 = vector.load %arg4[%c0_21, %c0_22] : memref<8x1xf32, #tpu.memory_space<vmem>>, vector<8x1xf32>
      tpu.vector_store %arg4[%c0_21, %c0_22], %27 {strides = array<i32>} : memref<8x1xf32, #tpu.memory_space<vmem>>, vector<8x1xf32>,
    } else {
    }
    %c0 = arith.constant 0 : index
    %c0_1 = arith.constant 0 : index
    %3 = vector.load %arg2[%c0, %c0_1] : memref<8x33xf32, #tpu.memory_space<vmem>>, vector<8x33xf32>
    %cst = arith.constant dense<0xFF800000> : vector<8xf32>
    %4 = vector.multi_reduction <maximumf>, %3, %cst [1] : vector<8x33xf32> to vector<8xf32>
    %5 = vector.shape_cast %4 : vector<8xf32> to vector<8x1xf32>
    %c0_2 = arith.constant 0 : index
    %c0_3 = arith.constant 0 : index
    %6 = vector.load %arg5[%c0_2, %c0_3] : memref<8x1xf32, #tpu.memory_space<vmem>>, vector<8x1xf32>
    %7 = arith.maximumf %6, %5 : vector<8x1xf32>
    %8 = arith.subf %6, %7 : vector<8x1xf32>
    %9 = math.exp %8 : vector<8x1xf32>
    %10 = vector.broadcast %7 : vector<8x1xf32> to vector<8x33xf32>
    %11 = arith.subf %3, %10 : vector<8x33xf32>
    %12 = math.exp %11 : vector<8x33xf32>
    %c0_4 = arith.constant 0 : index
    %c0_5 = arith.constant 0 : index
    %13 = vector.load %arg6[%c0_4, %c0_5] : memref<8x1xf32, #tpu.memory_space<vmem>>, vector<8x1xf32>
    %14 = arith.mulf %9, %13 : vector<8x1xf32>
    %cst_6 = arith.constant dense<0.000000e+00> : vector<8xf32>
    %15 = vector.multi_reduction <add>, %12, %cst_6 [1] : vector<8x33xf32> to vector<8xf32>
    %16 = vector.shape_cast %15 : vector<8xf32> to vector<8x1xf32>
    %17 = arith.addf %14, %16 : vector<8x1xf32>
    %c0_7 = arith.constant 0 : index
    %c0_8 = arith.constant 0 : index
    %18 = vector.load %arg6[%c0_7, %c0_8] : memref<8x1xf32, #tpu.memory_space<vmem>>, vector<8x1xf32>
    tpu.vector_store %arg6[%c0_7, %c0_8], %17 {strides = array<i32>} : memref<8x1xf32, #tpu.memory_space<vmem>>, vector<8x1xf32>,
    %c0_9 = arith.constant 0 : index
    %c0_10 = arith.constant 0 : index
    %19 = vector.load %arg5[%c0_9, %c0_10] : memref<8x1xf32, #tpu.memory_space<vmem>>, vector<8x1xf32>
    tpu.vector_store %arg5[%c0_9, %c0_10], %7 {strides = array<i32>} : memref<8x1xf32, #tpu.memory_space<vmem>>, vector<8x1xf32>,
    %c0_i32_11 = arith.constant 0 : i32
    %20 = arith.cmpi eq, %arg1, %c0_i32_11 : i32
    %21 = arith.extui %20 : i1 to i32
    %c0_i32_12 = arith.constant 0 : i32
    %22 = arith.cmpi ne, %21, %c0_i32_12 : i32
    scf.if %22 {
      %c0_13 = arith.constant 0 : index
      %c0_14 = arith.constant 0 : index
      %23 = vector.load %arg5[%c0_13, %c0_14] : memref<8x1xf32, #tpu.memory_space<vmem>>, vector<8x1xf32>
      %c0_15 = arith.constant 0 : index
      %c0_16 = arith.constant 0 : index
      %24 = vector.load %arg6[%c0_15, %c0_16] : memref<8x1xf32, #tpu.memory_space<vmem>>, vector<8x1xf32>
      %25 = math.log %24 : vector<8x1xf32>
      %26 = arith.addf %23, %25 : vector<8x1xf32>
      %c0_17 = arith.constant 0 : index
      %c0_18 = arith.constant 0 : index
      %27 = vector.load %arg4[%c0_17, %c0_18] : memref<8x1xf32, #tpu.memory_space<vmem>>, vector<8x1xf32>
      %28 = arith.subf %26, %27 : vector<8x1xf32>
      %c0_19 = arith.constant 0 : index
      %c0_20 = arith.constant 0 : index
      %29 = vector.load %arg3[%c0_19, %c0_20] : memref<8x1xf32, #tpu.memory_space<vmem>>, vector<8x1xf32>
      tpu.vector_store %arg3[%c0_19, %c0_20], %28 {strides = array<i32>} : memref<8x1xf32, #tpu.memory_space<vmem>>, vector<8x1xf32>,
    } else {
    }
    return
  }
  func.func @transform_0(%arg0: i32, %arg1: i32) -> (i32, i32) {
    %c0_i32 = arith.constant 0 : i32
    return %arg0, %arg1 : i32, i32
  }
  func.func @transform_1(%arg0: i32, %arg1: i32) -> (i32, i32) {
    %c0_i32 = arith.constant 0 : i32
    %c0_i32_0 = arith.constant 0 : i32
    return %arg0, %c0_i32 : i32, i32
  }
}

</mosaic_0001>

<llo_original>
// kernel: tpu_custom_call.1
$region0: #{tpu_custom_call.1}
  #allocation0 [shape = 'u32[]', space=smem, size = 0x4, offset = 0x4, fixed_abs, tag = 'smem constant byte address 0x4 - core index']
  #allocation1 [shape = 'u32[144,128]{1,0:T(1,128)}', space=vmem, size = 0x12000, scoped, tag = 'internal scratch']
  #allocation2 [shape = 'f32[8,1]{1,0:T(8,128)}', space=vmem, size = 0x1000, scoped, tag = 'scratch operand']
  #allocation3 [shape = 'f32[8,1]{1,0:T(8,128)}', space=vmem, size = 0x1000, scoped, tag = 'scratch operand']
  #allocation4 [shape = 'f32[8,1]{1,0:T(8,128)}', space=vmem, size = 0x1000, scoped, tag = 'scratch operand']
  %s0 = inlined_call_operand.hbm [shape: f32[8,33], index: 0, kind: input, shape index: {}]
  %s1 = inlined_call_operand.vmem [shape: f32[8,1], index: 1, kind: output, shape index: {}]
  %s2 = sld [smem:[#allocation0]]
  $region26: #{tpu_custom_call.1} parent=0
    _
  %s4 = ssub.s32 1, %s2
  %s5 = scalar_select 0, %s4, %s2
  $region1: #{tpu_custom_call.1} parent=0
    #allocation5 [shape = 'u8[4096]{0}', space=vmem, size = 0x1000, scoped, tag = 'input window, operand 0, single buffered']
    #allocation6 [shape = 's32[1]{0}', space=sflag, size = 0x4, scoped, tag = 'scoped memory for tpu_custom_call.1']
    %6 = vsyncpa [#allocation6], 0
    // Predicated region
    $region2: #{tpu_custom_call.1} parent=1 // pred_check
      _
    $region3: #{tpu_custom_call.1} parent=1 // pred_check_branch
      %8 = sbr.rel (0) target = $region5
    $region4: #{tpu_custom_call.1} parent=1 // pred_region
      %s10 = ssub.s32 128, 128
      %11 = vsyncadd [#allocation6], %s10
      %s13 = sshll.u32 [#allocation5], 4
      %s14 = int_to_ptr.vmem [resolvable:$true] %s13
      %16 = dma.hbm_to_vmem [thread:$0]  %s0, 128, %s14, [#allocation6]
    $region5: #{tpu_custom_call.1} parent=1 // pred_fallthru
      _
    // Predicated region
    $region6: #{tpu_custom_call.1} parent=1 // pred_check
      _
    $region7: #{tpu_custom_call.1} parent=1 // pred_check_branch
      %18 = sbr.rel (0) target = $region9
    $region8: #{tpu_custom_call.1} parent=1 // pred_region
      %19 = dma.done [#allocation6], 128
    $region9: #{tpu_custom_call.1} parent=1 // pred_fallthru
      _
    %p20 = scmp.eq.s32.totalorder 0, 0
    // Predicated region
    $region10: #{tpu_custom_call.1} parent=1 // pred_check
      %p21 = pneg %p20
    $region11: #{tpu_custom_call.1} parent=1 // pred_check_branch
      %23 = sbr.rel (%p21) target = $region13
    $region12: #{tpu_custom_call.1} parent=1 // pred_region
      %vm24 = vcmask 7168
      %25 = vst.msk [vmem:[#allocation3] sm:$0xff] %vm24, -1e+30
      %26 = vst.msk [vmem:[#allocation4] sm:$0xff] %vm24, 0.0
      %v27 = vld [vmem:[#allocation5] sm:$0xff]
      %28 = vst.msk [vmem:[#allocation2] sm:$0xff] %vm24, %v27
    $region13: #{tpu_custom_call.1} parent=1 // pred_fallthru
      _
    %v29 = vld [vmem:[#allocation5] sm:$0xff]
    %vm30 = vcmask 269312
    %v31 = vsel %vm30, %v29, -inf
    %32 = vmax.xlane.f32.xlu0 %v31
    %v33 = vpop.xlane.xlu0 %32
    %v34 = vld [vmem:[#allocation3] sm:$0xff]
    %v35 = vmax.f32 %v34, %v33
    %v36 = vsub.f32 %v34, %v35
    %v37 = vmul.f32 %v36, 1.442695
    %v38 = vpow.pop %v37
    %40 = vset.pattern.permute.xlu0 0
    %41 = vperm.xlu0 %40, %v35
    %v42 = vpop.permute.xlu0 %41
    %v44 = vsub.f32 %v29, %v42
    %v45 = vmul.f32 %v44, 1.442695
    %v46 = vpow.pop %v45
    %v47 = vld [vmem:[#allocation4] sm:$0xff]
    %v48 = vmul.f32 %v38, %v47
    %v49 = vsel %vm30, %v46, 0.0
    %50 = vadd.xlane.f32.xlu0 %v49
    %v51 = vpop.xlane.xlu0 %50
    %v52 = vadd.f32 %v48, %v51
    %vm53 = vcmask 7168
    %54 = vst.msk [vmem:[#allocation4] sm:$0xff] %vm53, %v52
    %55 = vst.msk [vmem:[#allocation3] sm:$0xff] %vm53, %v35
    // Predicated region
    $region14: #{tpu_custom_call.1} parent=1 // pred_check
      %p56 = pneg %p20
    $region15: #{tpu_custom_call.1} parent=1 // pred_check_branch
      %58 = sbr.rel (%p56) target = $region17
    $region16: #{tpu_custom_call.1} parent=1 // pred_region
      %v59 = vld [vmem:[#allocation3] sm:$0xff]
      %v60 = vld [vmem:[#allocation4] sm:$0xff]
      %v61 = vlog2.pop %v60
      %v62 = vmul.f32 %v61, 0.6931472
      %v63 = vadd.f32 %v59, %v62
      %v64 = vld [vmem:[#allocation2] sm:$0xff]
      %v65 = vsub.f32 %v63, %v64
      %66 = vst.msk [vmem:[%s1] sm:$0xff] %vm53, %v65
    $region17: #{tpu_custom_call.1} parent=1 // pred_fallthru
      _
    // Predicated region
    $region18: #{tpu_custom_call.1} parent=1 // pred_check
      _
    $region19: #{tpu_custom_call.1} parent=1 // pred_check_branch
      %68 = sbr.rel (0) target = $region21
    $region20: #{tpu_custom_call.1} parent=1 // pred_region
      _
    $region21: #{tpu_custom_call.1} parent=1 // pred_fallthru
      _
    // Predicated region
    $region22: #{tpu_custom_call.1} parent=1 // pred_check
      _
    $region23: #{tpu_custom_call.1} parent=1 // pred_check_branch
      %70 = sbr.rel (0) target = $region25
    $region24: #{tpu_custom_call.1} parent=1 // pred_region
      _
    $region25: #{tpu_custom_call.1} parent=1 // pred_fallthru
      _
    %71 = vsyncpa [#allocation6], 1

</llo_original>
